<compile_context>
chip_gen: v7x
topology: tpu7x:2x2x1
jax: 0.10.0
libtpu: 0.0.40
codegen_flags: <defaults>
</compile_context>

<pallas_src>
import jax
import jax.numpy as jnp
from jax.experimental import pallas as pl
from jax.experimental.pallas import tpu as pltpu


# ---------------------------------------------------------------------------
# Pallas kernels
# ---------------------------------------------------------------------------
def _make_rsoftmax_kernel(cardinality, radix, rest):
    def kernel(x_ref, o_ref):
        # x_ref: (TB, card, radix, rest)    o_ref: (TB, radix, card*rest)
        x = x_ref[...].astype(jnp.float32)
        m = jnp.max(x, axis=2, keepdims=True)            # reduce over radix
        e = jnp.exp(x - m)
        s = jnp.sum(e, axis=2, keepdims=True)
        y = e * pl.reciprocal(s, approx=False)           # EUP recip + VPU mul
        # Transposed (radix-major) write: out[b, r, c*rest + j] = y[b, c, r, j].
        # Slicing the untiled cardinality axis keeps the (radix, rest) vreg
        # layout intact; only lane-offset stores are required.
        for c in range(cardinality):
            o_ref[:, :, c * rest:(c + 1) * rest] = y[:, c, :, :].astype(o_ref.dtype)
    return kernel


def _sigmoid_kernel(x_ref, o_ref):
    x = x_ref[...].astype(jnp.float32)
    o_ref[...] = pl.reciprocal(1.0 + jnp.exp(-x), approx=False).astype(o_ref.dtype)


# ---------------------------------------------------------------------------
# Tile sizing (conservative so blocks also fit v7x's smaller scoped VMEM)
# ---------------------------------------------------------------------------
def _round_up(v, m):
    return ((v + m - 1) // m) * m


def _pick_batch_tile(batch, cardinality, radix, rest, itemsize):
    # Padded VMEM footprint of one batch row: input tiles are (radix, rest)
    # padded to (8k, 128k); output tiles are (radix, card*rest).  Budget for
    # double-buffered blocks plus a few fp32 temporaries.
    pad_in = cardinality * _round_up(radix, 8) * _round_up(rest, 128)
    pad_out = _round_up(radix, 8) * _round_up(cardinality * rest, 128)
    per_row = 2 * itemsize * (pad_in + pad_out) + 3 * 4 * pad_in
    budget = 6 * 1024 * 1024
    return max(1, min(batch, 256, budget // max(per_row, 1)))


# ---------------------------------------------------------------------------
# Wrapper (only free reshapes outside the kernel — no XLA transpose)
# ---------------------------------------------------------------------------
def rsoftmax(x, radix, cardinality):
    batch = x.shape[0]
    if radix > 1:
        rest = x.size // (batch * cardinality * radix)
        n_out = cardinality * rest
        xr = x.reshape(batch, cardinality, radix, rest)   # free view
        tb = _pick_batch_tile(batch, cardinality, radix, rest,
                              jnp.dtype(x.dtype).itemsize)
        out = pl.pallas_call(
            _make_rsoftmax_kernel(cardinality, radix, rest),
            out_shape=jax.ShapeDtypeStruct((batch, radix, n_out), x.dtype),
            grid=(pl.cdiv(batch, tb),),
            in_specs=[pl.BlockSpec((tb, cardinality, radix, rest),
                                   lambda b: (b, 0, 0, 0))],
            out_specs=pl.BlockSpec((tb, radix, n_out), lambda b: (b, 0, 0)),
            compiler_params=pltpu.CompilerParams(
                dimension_semantics=("parallel",)),
        )(xr)
        return out.reshape(batch, -1)                     # free view
    else:
        flat = x.reshape(batch, -1)
        b, m = flat.shape
        tb = b if b <= 256 else 256      # full dim, or multiple of 8
        tm = m if m <= 1024 else 1024    # full dim, or multiple of 128
        out = pl.pallas_call(
            _sigmoid_kernel,
            out_shape=jax.ShapeDtypeStruct((b, m), x.dtype),
            grid=(pl.cdiv(b, tb), pl.cdiv(m, tm)),
            in_specs=[pl.BlockSpec((tb, tm), lambda i, j: (i, j))],
            out_specs=pl.BlockSpec((tb, tm), lambda i, j: (i, j)),
            compiler_params=pltpu.CompilerParams(
                dimension_semantics=("parallel", "parallel")),
        )(flat)
        return out.reshape(x.shape)


# ---------------------------------------------------------------------------
# Pure-JAX reference (correctness check only)
# ---------------------------------------------------------------------------
def rsoftmax_ref(x, radix, cardinality):
    batch = x.shape[0]
    if radix > 1:
        rest = x.size // (batch * cardinality * radix)
        xt = x.reshape(batch, cardinality, radix, rest)
        xt = jnp.transpose(xt, (0, 2, 1, 3))
        xt = jax.nn.softmax(xt.astype(jnp.float32), axis=1).astype(x.dtype)
        return xt.reshape(batch, -1)
    return jax.nn.sigmoid(x)


# ---------------------------------------------------------------------------
if __name__ == "__main__":
    key = jax.random.PRNGKey(0)
    k1, k2, k3 = jax.random.split(key, 3)

    # --- radix > 1, cardinality > 1 ---
    radix, cardinality = 2, 4
    rest = 16
    channels = cardinality * radix * rest            # 128
    x = jax.random.normal(k1, (2, channels, 1, 1), dtype=jnp.float32)
    out = jax.block_until_ready(rsoftmax(x, radix, cardinality))
    ref = rsoftmax_ref(x, radix, cardinality)
    assert out.shape == ref.shape
    assert jnp.allclose(out, ref, atol=1e-5, rtol=1e-5), "radix>1, card>1 mismatch"

    # --- radix > 1, cardinality == 1 (standard ResNeSt config) ---
    x2 = jax.random.normal(k3, (2, 2 * 32, 1, 1), dtype=jnp.float32)
    out2 = jax.block_until_ready(rsoftmax(x2, radix=2, cardinality=1))
    ref2 = rsoftmax_ref(x2, radix=2, cardinality=1)
    assert out2.shape == ref2.shape
    assert jnp.allclose(out2, ref2, atol=1e-5, rtol=1e-5), "radix>1, card==1 mismatch"

    # --- radix == 1 path (sigmoid) ---
    x1 = jax.random.normal(k2, (2, 4, 16, 16), dtype=jnp.float32)
    out1 = jax.block_until_ready(rsoftmax(x1, radix=1, cardinality=1))
    ref1 = rsoftmax_ref(x1, radix=1, cardinality=1)
    assert out1.shape == ref1.shape
    assert jnp.allclose(out1, ref1, atol=1e-5, rtol=1e-5), "radix==1 mismatch"

    print("KERNEL_OK")
</pallas_src>

<mosaic_0001>
module attributes {stable_mosaic.version = 11 : i64} {
  func.func @kernel(%arg0: i32, %arg1: memref<2x4x2x16xf32, #tpu.memory_space<vmem>>, %arg2: memref<2x2x64xf32, #tpu.memory_space<vmem>>) attributes {dimension_semantics = [#tpu.dimension_semantics<parallel>], iteration_bounds = array<i64: 1>, scalar_prefetch = 0 : i64, scratch_operands = 0 : i64, tpu.core_type = #tpu.core_type<tc>, window_params = [{transform_indices = @transform_0, window_bounds = array<i64: 2, 4, 2, 16>}, {transform_indices = @transform_1, window_bounds = array<i64: 2, 2, 64>}]} {
    %c0 = arith.constant 0 : index
    %c0_0 = arith.constant 0 : index
    %c0_1 = arith.constant 0 : index
    %c0_2 = arith.constant 0 : index
    %0 = vector.load %arg1[%c0, %c0_0, %c0_1, %c0_2] : memref<2x4x2x16xf32, #tpu.memory_space<vmem>>, vector<2x4x2x16xf32>
    %cst = arith.constant dense<0xFF800000> : vector<2x4x16xf32>
    %1 = vector.multi_reduction <maximumf>, %0, %cst [2] : vector<2x4x2x16xf32> to vector<2x4x16xf32>
    %2 = vector.shape_cast %1 : vector<2x4x16xf32> to vector<2x4x1x16xf32>
    %3 = vector.broadcast %2 : vector<2x4x1x16xf32> to vector<2x4x2x16xf32>
    %4 = arith.subf %0, %3 : vector<2x4x2x16xf32>
    %5 = math.exp %4 : vector<2x4x2x16xf32>
    %cst_3 = arith.constant dense<0.000000e+00> : vector<2x4x16xf32>
    %6 = vector.multi_reduction <add>, %5, %cst_3 [2] : vector<2x4x2x16xf32> to vector<2x4x16xf32>
    %7 = vector.shape_cast %6 : vector<2x4x16xf32> to vector<2x4x1x16xf32>
    %8 = tpu.reciprocal %7 : vector<2x4x1x16xf32> -> vector<2x4x1x16xf32>
    %9 = vector.broadcast %8 : vector<2x4x1x16xf32> to vector<2x4x2x16xf32>
    %10 = arith.mulf %5, %9 : vector<2x4x2x16xf32>
    %11 = vector.extract_strided_slice %10 {offsets = [0, 0, 0, 0], sizes = [2, 1, 2, 16], strides = [1, 1, 1, 1]} : vector<2x4x2x16xf32> to vector<2x1x2x16xf32>
    %12 = vector.shape_cast %11 : vector<2x1x2x16xf32> to vector<2x2x16xf32>
    %c0_4 = arith.constant 0 : index
    %c0_5 = arith.constant 0 : index
    %c0_6 = arith.constant 0 : index
    %13 = vector.load %arg2[%c0_4, %c0_5, %c0_6] : memref<2x2x64xf32, #tpu.memory_space<vmem>>, vector<2x2x16xf32>
    tpu.vector_store %arg2[%c0_4, %c0_5, %c0_6], %12 {strides = array<i32>} : memref<2x2x64xf32, #tpu.memory_space<vmem>>, vector<2x2x16xf32>,
    %14 = vector.extract_strided_slice %10 {offsets = [0, 1, 0, 0], sizes = [2, 1, 2, 16], strides = [1, 1, 1, 1]} : vector<2x4x2x16xf32> to vector<2x1x2x16xf32>
    %15 = vector.shape_cast %14 : vector<2x1x2x16xf32> to vector<2x2x16xf32>
    %c0_7 = arith.constant 0 : index
    %c0_8 = arith.constant 0 : index
    %c16 = arith.constant 16 : index
    %16 = vector.load %arg2[%c0_7, %c0_8, %c16] : memref<2x2x64xf32, #tpu.memory_space<vmem>>, vector<2x2x16xf32>
    tpu.vector_store %arg2[%c0_7, %c0_8, %c16], %15 {strides = array<i32>} : memref<2x2x64xf32, #tpu.memory_space<vmem>>, vector<2x2x16xf32>,
    %17 = vector.extract_strided_slice %10 {offsets = [0, 2, 0, 0], sizes = [2, 1, 2, 16], strides = [1, 1, 1, 1]} : vector<2x4x2x16xf32> to vector<2x1x2x16xf32>
    %18 = vector.shape_cast %17 : vector<2x1x2x16xf32> to vector<2x2x16xf32>
    %c0_9 = arith.constant 0 : index
    %c0_10 = arith.constant 0 : index
    %c32 = arith.constant 32 : index
    %19 = vector.load %arg2[%c0_9, %c0_10, %c32] : memref<2x2x64xf32, #tpu.memory_space<vmem>>, vector<2x2x16xf32>
    tpu.vector_store %arg2[%c0_9, %c0_10, %c32], %18 {strides = array<i32>} : memref<2x2x64xf32, #tpu.memory_space<vmem>>, vector<2x2x16xf32>,
    %20 = vector.extract_strided_slice %10 {offsets = [0, 3, 0, 0], sizes = [2, 1, 2, 16], strides = [1, 1, 1, 1]} : vector<2x4x2x16xf32> to vector<2x1x2x16xf32>
    %21 = vector.shape_cast %20 : vector<2x1x2x16xf32> to vector<2x2x16xf32>
    %c0_11 = arith.constant 0 : index
    %c0_12 = arith.constant 0 : index
    %c48 = arith.constant 48 : index
    %22 = vector.load %arg2[%c0_11, %c0_12, %c48] : memref<2x2x64xf32, #tpu.memory_space<vmem>>, vector<2x2x16xf32>
    tpu.vector_store %arg2[%c0_11, %c0_12, %c48], %21 {strides = array<i32>} : memref<2x2x64xf32, #tpu.memory_space<vmem>>, vector<2x2x16xf32>,
    return
  }
  func.func @transform_0(%arg0: i32) -> (i32, i32, i32, i32) {
    %c0_i32 = arith.constant 0 : i32
    %c0_i32_0 = arith.constant 0 : i32
    %c0_i32_1 = arith.constant 0 : i32
    %c0_i32_2 = arith.constant 0 : i32
    return %arg0, %c0_i32, %c0_i32_0, %c0_i32_1 : i32, i32, i32, i32
  }
  func.func @transform_1(%arg0: i32) -> (i32, i32, i32) {
    %c0_i32 = arith.constant 0 : i32
    %c0_i32_0 = arith.constant 0 : i32
    %c0_i32_1 = arith.constant 0 : i32
    return %arg0, %c0_i32, %c0_i32_0 : i32, i32, i32
  }
}

</mosaic_0001>

<llo_original>
// kernel: tpu_custom_call.1
$region0: #{tpu_custom_call.1}
  #allocation0 [shape = 'u32[]', space=smem, size = 0x4, offset = 0x4, fixed_abs, tag = 'smem constant byte address 0x4 - core index']
  #allocation1 [shape = 'u32[144,128]{1,0:T(1,128)}', space=vmem, size = 0x12000, scoped, tag = 'internal scratch']
  %s0 = inlined_call_operand.hbm [shape: f32[2,4,2,16], index: 0, kind: input, shape index: {}]
  %s1 = inlined_call_operand.hbm [shape: f32[2,2,64], index: 1, kind: output, shape index: {}]
  %s2 = sld [smem:[#allocation0]]
  $region18: #{tpu_custom_call.1} parent=0
    _
  %s4 = ssub.s32 1, %s2
  %s5 = scalar_select 0, %s4, %s2
  $region1: #{tpu_custom_call.1} parent=0
    #allocation2 [shape = 'u8[8192]{0}', space=vmem, size = 0x2000, scoped, tag = 'input window, operand 0, single buffered']
    #allocation3 [shape = 's32[1]{0}', space=sflag, size = 0x4, scoped, tag = 'scoped memory for tpu_custom_call.1']
    #allocation4 [shape = 's32[1]{0}', space=sflag, size = 0x4, scoped, tag = 'scoped memory for tpu_custom_call.1']
    #allocation5 [shape = 'u8[2048]{0}', space=vmem, size = 0x800, scoped, tag = 'output window, operand 0, single buffered']
    %6 = vsyncpa [#allocation3], 0
    %7 = vsyncpa [#allocation4], 0
    // Predicated region
    $region2: #{tpu_custom_call.1} parent=1 // pred_check
      _
    $region3: #{tpu_custom_call.1} parent=1 // pred_check_branch
      %9 = sbr.rel (0) target = $region5
    $region4: #{tpu_custom_call.1} parent=1 // pred_region
      %s11 = ssub.s32 256, 256
      %12 = vsyncadd [#allocation3], %s11
      %s13 = sshll.u32 [#allocation2], 4
      %s14 = int_to_ptr.vmem [resolvable:$true] %s13
      %19 = dma.hbm_to_vmem [thread:$0]  %s0, 256, %s14, [#allocation3], 32, 32, 2
    $region5: #{tpu_custom_call.1} parent=1 // pred_fallthru
      _
    // Predicated region
    $region6: #{tpu_custom_call.1} parent=1 // pred_check
      _
    $region7: #{tpu_custom_call.1} parent=1 // pred_check_branch
      %21 = sbr.rel (0) target = $region9
    $region8: #{tpu_custom_call.1} parent=1 // pred_region
      %22 = dma.done [#allocation3], 256
    $region9: #{tpu_custom_call.1} parent=1 // pred_fallthru
      _
    %v23 = vld [vmem:[#allocation2] sm:$0x3]
    %v24 = vld [vmem:[#allocation2 + $0x2] sm:$0x3]
    %v25 = vld [vmem:[#allocation2 + $0x4] sm:$0x3]
    %v26 = vld [vmem:[#allocation2 + $0x6] sm:$0x3]
    %v27 = vld [vmem:[#allocation2 + $0x8] sm:$0x3]
    %v28 = vld [vmem:[#allocation2 + $0xa] sm:$0x3]
    %v29 = vld [vmem:[#allocation2 + $0xc] sm:$0x3]
    %v30 = vld [vmem:[#allocation2 + $0xe] sm:$0x3]
    %vm31 = vcmask 123904
    %v32 = vsel %vm31, %v23, -inf
    %v33 = vrot.slane %v32, 4
    %v34 = vmax.f32 %v32, %v33
    %v35 = vrot.slane %v34, 2
    %v36 = vmax.f32 %v34, %v35
    %v37 = vrot.slane %v36, 1
    %v38 = vmax.f32 %v36, %v37
    %v39 = vsel %vm31, %v24, -inf
    %v40 = vrot.slane %v39, 4
    %v41 = vmax.f32 %v39, %v40
    %v42 = vrot.slane %v41, 2
    %v43 = vmax.f32 %v41, %v42
    %v44 = vrot.slane %v43, 1
    %v45 = vmax.f32 %v43, %v44
    %v46 = vsel %vm31, %v25, -inf
    %v47 = vrot.slane %v46, 4
    %v48 = vmax.f32 %v46, %v47
    %v49 = vrot.slane %v48, 2
    %v50 = vmax.f32 %v48, %v49
    %v51 = vrot.slane %v50, 1
    %v52 = vmax.f32 %v50, %v51
    %v53 = vsel %vm31, %v26, -inf
    %v54 = vrot.slane %v53, 4
    %v55 = vmax.f32 %v53, %v54
    %v56 = vrot.slane %v55, 2
    %v57 = vmax.f32 %v55, %v56
    %v58 = vrot.slane %v57, 1
    %v59 = vmax.f32 %v57, %v58
    %v60 = vsel %vm31, %v27, -inf
    %v61 = vrot.slane %v60, 4
    %v62 = vmax.f32 %v60, %v61
    %v63 = vrot.slane %v62, 2
    %v64 = vmax.f32 %v62, %v63
    %v65 = vrot.slane %v64, 1
    %v66 = vmax.f32 %v64, %v65
    %v67 = vsel %vm31, %v28, -inf
    %v68 = vrot.slane %v67, 4
    %v69 = vmax.f32 %v67, %v68
    %v70 = vrot.slane %v69, 2
    %v71 = vmax.f32 %v69, %v70
    %v72 = vrot.slane %v71, 1
    %v73 = vmax.f32 %v71, %v72
    %v74 = vsel %vm31, %v29, -inf
    %v75 = vrot.slane %v74, 4
    %v76 = vmax.f32 %v74, %v75
    %v77 = vrot.slane %v76, 2
    %v78 = vmax.f32 %v76, %v77
    %v79 = vrot.slane %v78, 1
    %v80 = vmax.f32 %v78, %v79
    %v81 = vsel %vm31, %v30, -inf
    %v82 = vrot.slane %v81, 4
    %v83 = vmax.f32 %v81, %v82
    %v84 = vrot.slane %v83, 2
    %v85 = vmax.f32 %v83, %v84
    %v86 = vrot.slane %v85, 1
    %v87 = vmax.f32 %v85, %v86
    %v88 = vsub.f32 %v23, %v38
    %v89 = vsub.f32 %v24, %v45
    %v90 = vsub.f32 %v25, %v52
    %v91 = vsub.f32 %v26, %v59
    %v92 = vsub.f32 %v27, %v66
    %v93 = vsub.f32 %v28, %v73
    %v94 = vsub.f32 %v29, %v80
    %v95 = vsub.f32 %v30, %v87
    %v96 = vmul.f32 %v88, 1.442695
    %v97 = vpow.pop %v96
    %v98 = vmul.f32 %v89, 1.442695
    %v99 = vpow.pop %v98
    %v100 = vmul.f32 %v90, 1.442695
    %v101 = vpow.pop %v100
    %v102 = vmul.f32 %v91, 1.442695
    %v103 = vpow.pop %v102
    %v104 = vmul.f32 %v92, 1.442695
    %v105 = vpow.pop %v104
    %v106 = vmul.f32 %v93, 1.442695
    %v107 = vpow.pop %v106
    %v108 = vmul.f32 %v94, 1.442695
    %v109 = vpow.pop %v108
    %v110 = vmul.f32 %v95, 1.442695
    %v111 = vpow.pop %v110
    %v112 = vsel %vm31, %v97, 0.0
    %v113 = vrot.slane %v112, 4
    %v114 = vadd.f32 %v112, %v113
    %v115 = vrot.slane %v114, 2
    %v116 = vadd.f32 %v114, %v115
    %v117 = vrot.slane %v116, 1
    %v118 = vadd.f32 %v116, %v117
    %v119 = vsel %vm31, %v99, 0.0
    %v120 = vrot.slane %v119, 4
    %v121 = vadd.f32 %v119, %v120
    %v122 = vrot.slane %v121, 2
    %v123 = vadd.f32 %v121, %v122
    %v124 = vrot.slane %v123, 1
    %v125 = vadd.f32 %v123, %v124
    %v126 = vsel %vm31, %v101, 0.0
    %v127 = vrot.slane %v126, 4
    %v128 = vadd.f32 %v126, %v127
    %v129 = vrot.slane %v128, 2
    %v130 = vadd.f32 %v128, %v129
    %v131 = vrot.slane %v130, 1
    %v132 = vadd.f32 %v130, %v131
    %v133 = vsel %vm31, %v103, 0.0
    %v134 = vrot.slane %v133, 4
    %v135 = vadd.f32 %v133, %v134
    %v136 = vrot.slane %v135, 2
    %v137 = vadd.f32 %v135, %v136
    %v138 = vrot.slane %v137, 1
    %v139 = vadd.f32 %v137, %v138
    %v140 = vsel %vm31, %v105, 0.0
    %v141 = vrot.slane %v140, 4
    %v142 = vadd.f32 %v140, %v141
    %v143 = vrot.slane %v142, 2
    %v144 = vadd.f32 %v142, %v143
    %v145 = vrot.slane %v144, 1
    %v146 = vadd.f32 %v144, %v145
    %v147 = vsel %vm31, %v107, 0.0
    %v148 = vrot.slane %v147, 4
    %v149 = vadd.f32 %v147, %v148
    %v150 = vrot.slane %v149, 2
    %v151 = vadd.f32 %v149, %v150
    %v152 = vrot.slane %v151, 1
    %v153 = vadd.f32 %v151, %v152
    %v154 = vsel %vm31, %v109, 0.0
    %v155 = vrot.slane %v154, 4
    %v156 = vadd.f32 %v154, %v155
    %v157 = vrot.slane %v156, 2
    %v158 = vadd.f32 %v156, %v157
    %v159 = vrot.slane %v158, 1
    %v160 = vadd.f32 %v158, %v159
    %v161 = vsel %vm31, %v111, 0.0
    %v162 = vrot.slane %v161, 4
    %v163 = vadd.f32 %v161, %v162
    %v164 = vrot.slane %v163, 2
    %v165 = vadd.f32 %v163, %v164
    %v166 = vrot.slane %v165, 1
    %v167 = vadd.f32 %v165, %v166
    %v168 = vrcp.pop %v118
    %v169 = vrcp.pop %v125
    %v170 = vrcp.pop %v132
    %v171 = vrcp.pop %v139
    %v172 = vrcp.pop %v146
    %v173 = vrcp.pop %v153
    %v174 = vrcp.pop %v160
    %v175 = vrcp.pop %v167
    %v176 = vmul.f32 %v97, %v168
    %v177 = vmul.f32 %v99, %v169
    %v178 = vmul.f32 %v101, %v170
    %v179 = vmul.f32 %v103, %v171
    %v180 = vmul.f32 %v105, %v172
    %v181 = vmul.f32 %v107, %v173
    %v182 = vmul.f32 %v109, %v174
    %v183 = vmul.f32 %v111, %v175
    %184 = vst.msk [vmem:[#allocation5] sm:$0x3] %vm31, %v176
    %185 = vst.msk [vmem:[#allocation5 + $0x2] sm:$0x3] %vm31, %v180
    %188 = vrot.lane.b32.xlu0 %v177, 16
    %v189 = vpop.permute.xlu0 %188
    %190 = vrot.lane.b32.xlu0 %v181, 16
    %v191 = vpop.permute.xlu0 %190
    %vm194 = vcmask 255104
    %195 = vst.msk [vmem:[#allocation5] sm:$0x3] %vm194, %v189
    %196 = vst.msk [vmem:[#allocation5 + $0x2] sm:$0x3] %vm194, %v191
    %199 = vrot.lane.b32.xlu0 %v178, 32
    %v200 = vpop.permute.xlu0 %199
    %201 = vrot.lane.b32.xlu0 %v182, 32
    %v202 = vpop.permute.xlu0 %201
    %vm205 = vcmask 386304
    %206 = vst.msk [vmem:[#allocation5] sm:$0x3] %vm205, %v200
    %207 = vst.msk [vmem:[#allocation5 + $0x2] sm:$0x3] %vm205, %v202
    %210 = vrot.lane.b32.xlu0 %v179, 48
    %v211 = vpop.permute.xlu0 %210
    %212 = vrot.lane.b32.xlu0 %v183, 48
    %v213 = vpop.permute.xlu0 %212
    %vm216 = vcmask 517504
    %217 = vst.msk [vmem:[#allocation5] sm:$0x3] %vm216, %v211
    %218 = vst.msk [vmem:[#allocation5 + $0x2] sm:$0x3] %vm216, %v213
    // Predicated region
    $region10: #{tpu_custom_call.1} parent=1 // pred_check
      _
    $region11: #{tpu_custom_call.1} parent=1 // pred_check_branch
      %220 = sbr.rel (0) target = $region13
    $region12: #{tpu_custom_call.1} parent=1 // pred_region
      %s222 = ssub.s32 64, 64
      %223 = vsyncadd [#allocation4], %s222
      %s224 = sshll.u32 [#allocation5], 4
      %s225 = int_to_ptr.vmem [resolvable:$true] %s224
      %230 = dma.vmem_to_hbm [thread:$0]  %s225, 64, %s1, [#allocation4], 32, 32, 2
    $region13: #{tpu_custom_call.1} parent=1 // pred_fallthru
      _
    // Predicated region
    $region14: #{tpu_custom_call.1} parent=1 // pred_check
      _
    $region15: #{tpu_custom_call.1} parent=1 // pred_check_branch
      %232 = sbr.rel (0) target = $region17
    $region16: #{tpu_custom_call.1} parent=1 // pred_region
      %233 = dma.done [#allocation4], 64
    $region17: #{tpu_custom_call.1} parent=1 // pred_fallthru
      _
    %234 = vsyncpa [#allocation3], 1
    %235 = vsyncpa [#allocation4], 1

</llo_original>
